<compile_context>
chip_gen: v5e
topology: v5e:2x2
jax: 0.10.0
libtpu: 0.0.40
codegen_flags: <defaults>
</compile_context>

<pallas_src>
import jax
import jax.numpy as jnp
from jax.experimental import pallas as pl
from jax.experimental.pallas import tpu as pltpu


def _round_up(a: int, b: int) -> int:
    return (a + b - 1) // b * b


def _deconv_matmul_kernel(x_ref, w_ref, o_ref):
    # x_ref: (tm, H) input dtype; w_ref: (H, Np) compute dtype (resident);
    # o_ref: (tm, Np) out dtype.  Cast x inside the kernel (no extra HBM copy
    # in the wrapper); accumulate in f32 on the MXU.
    x = x_ref[...].astype(w_ref.dtype)
    o_ref[...] = jnp.dot(
        x, w_ref[...], preferred_element_type=jnp.float32
    ).astype(o_ref.dtype)


def prepare_embed_patching_weight(weight, compute_dtype=jnp.bfloat16):
    """One-time weight prep (hoisted out of forward): torch ConvTranspose1d
    weight (H, C, P) -> (H, Np) matmul operand with p-major / c-minor columns,
    lane-padded along N only when needed, cast to the MXU compute dtype."""
    H, C, P = weight.shape
    N = C * P
    w2 = jnp.transpose(weight, (0, 2, 1)).reshape(H, N)  # w2[h, p*C + c]
    Np = N if N % 128 == 0 else _round_up(N, 256)  # 256-wide MXU on v6e/v7x
    if Np != N:
        w2 = jnp.pad(w2, ((0, 0), (0, Np - N)))
    return w2.astype(compute_dtype)


def embed_patching_forward(x, weight, *, prepared_weight=None, tm=2048,
                           compute_dtype=jnp.bfloat16, out_dtype=None,
                           force_pallas=False):
    """EmbedPatching.forward with use_pre_head=False.

    x: (B, L, H); weight: (H, C, P) torch ConvTranspose1d layout (used for
    shape metadata -- pass `prepared_weight` from
    prepare_embed_patching_weight to skip the per-call weight rearrangement).
    Returns (B, L*P, C).  Set out_dtype=jnp.bfloat16 to halve the output
    writeback (accumulation stays f32).
    """
    B, L, H = x.shape
    H_w, C, P = weight.shape
    assert H == H_w
    M, N = B * L, P * C
    out_dtype = x.dtype if out_dtype is None else out_dtype

    if prepared_weight is None:
        prepared_weight = prepare_embed_patching_weight(weight, compute_dtype)
    Np = prepared_weight.shape[1]
    assert prepared_weight.shape[0] == H and Np >= N

    x_flat = x.reshape(M, H)  # contiguous reshape, no copy

    # Short-sequence fallback: 1-2 grid steps pay custom-call + step overhead
    # with no pipelining benefit (and idle a v7x TC); let XLA fuse instead.
    if not force_pallas and M <= 2 * tm:
        out_flat = jnp.dot(
            x_flat.astype(compute_dtype), prepared_weight[:, :N],
            preferred_element_type=jnp.float32,
        ).astype(out_dtype)
        return out_flat.reshape(B, L * P, C)

    # M tiling: shrink tm so the grid has >= 2 steps (keeps both v7x cores
    # busy); the ragged last block is handled by Pallas' masked partial store.
    tm_eff = min(tm, _round_up(pl.cdiv(M, 2), 8))
    if tm_eff > M:
        tm_eff = M
    grid_m = pl.cdiv(M, tm_eff)

    x_bytes = jnp.dtype(x.dtype).itemsize
    w_bytes = jnp.dtype(prepared_weight.dtype).itemsize
    o_bytes = jnp.dtype(out_dtype).itemsize
    cost = pl.CostEstimate(
        flops=2 * M * Np * H,
        bytes_accessed=M * H * x_bytes + H * Np * w_bytes + M * Np * o_bytes,
        transcendentals=0,
    )
    # Live tile set (double-buffered x/out, weight x2 buffers); give the
    # scoped VMEM limit 2x headroom so tm=2048 f32-out compiles on v5e's
    # 16 MiB default while staying under v7x's 64 MiB physical budget.
    vmem_est = (2 * tm_eff * H * x_bytes + 2 * H * Np * w_bytes
                + 2 * tm_eff * Np * o_bytes)
    vmem_limit = int(min(max(2 * vmem_est, 32 << 20), 64 << 20))

    out_flat = pl.pallas_call(
        _deconv_matmul_kernel,
        out_shape=jax.ShapeDtypeStruct((M, Np), out_dtype),
        grid=(grid_m,),
        in_specs=[
            pl.BlockSpec((tm_eff, H), lambda i: (i, 0)),
            pl.BlockSpec((H, Np), lambda i: (0, 0)),  # resident, DMA'd once
        ],
        out_specs=pl.BlockSpec((tm_eff, Np), lambda i: (i, 0)),
        compiler_params=pltpu.CompilerParams(
            dimension_semantics=("parallel",),
            vmem_limit_bytes=vmem_limit,
        ),
        cost_estimate=cost,
    )(x_flat, prepared_weight)

    if Np != N:  # only for non-lane-aligned (tiny) configs; prod N=768 skips
        out_flat = out_flat[:, :N]
    # out_flat[b*L + l, p*C + c] == out[b, l*P + p, c]; free reshape.
    return out_flat.reshape(B, L * P, C)


if __name__ == "__main__":
    # Small shapes consistent with the module:
    # batch=2, seq(L)=8, num_hiddens=32, num_channels=4, patch_size=8.
    B, L, H, C, P = 2, 8, 32, 4, 8

    key = jax.random.PRNGKey(0)
    kx, kw = jax.random.split(key)
    x = jax.random.normal(kx, (B, L, H), dtype=jnp.float32)
    # torch ConvTranspose1d weight shape: (in_channels, out_channels, kernel)
    weight = jax.random.normal(kw, (H, C, P), dtype=jnp.float32) * 0.02

    # Weight prep hoisted out of the forward path (done once at init time).
    w_prep = prepare_embed_patching_weight(weight)

    out = embed_patching_forward(x, weight, prepared_weight=w_prep,
                                 force_pallas=True)
    out = jax.block_until_ready(out)
    assert out.shape == (B, L * P, C), out.shape
    assert out.dtype == x.dtype

    # Reference: same deconv semantics with the same bf16-operand / f32-accum
    # numerics as the kernel.
    xb = x.astype(jnp.bfloat16).astype(jnp.float32)
    wb = weight.astype(jnp.bfloat16).astype(jnp.float32)
    ref = jnp.einsum("blh,hcp->blpc", xb, wb).reshape(B, L * P, C)
    assert jnp.allclose(out, ref, atol=1e-4, rtol=1e-4), (
        float(jnp.max(jnp.abs(out - ref))))

    print("KERNEL_OK")
</pallas_src>

<mosaic_0001>
module attributes {stable_mosaic.version = 11 : i64} {
  func.func @_deconv_matmul_kernel(%arg0: i32, %arg1: memref<8x32xf32, #tpu.memory_space<vmem>>, %arg2: memref<32x256xbf16, #tpu.memory_space<vmem>>, %arg3: memref<8x256xf32, #tpu.memory_space<vmem>>) attributes {dimension_semantics = [#tpu.dimension_semantics<parallel>], iteration_bounds = array<i64: 2>, scalar_prefetch = 0 : i64, scratch_operands = 0 : i64, tpu.core_type = #tpu.core_type<tc>, window_params = [{transform_indices = @transform_0, window_bounds = array<i64: 8, 32>}, {pipeline_mode = #tpu.pipeline_mode<synchronous>, transform_indices = @transform_1, window_bounds = array<i64: 32, 256>}, {transform_indices = @transform_2, window_bounds = array<i64: 8, 256>}]} {
    %c0 = arith.constant 0 : index
    %c0_0 = arith.constant 0 : index
    %0 = vector.load %arg1[%c0, %c0_0] : memref<8x32xf32, #tpu.memory_space<vmem>>, vector<8x32xf32>
    %1 = arith.truncf %0 : vector<8x32xf32> to vector<8x32xbf16>
    %c0_1 = arith.constant 0 : index
    %c0_2 = arith.constant 0 : index
    %2 = vector.load %arg2[%c0_1, %c0_2] : memref<32x256xbf16, #tpu.memory_space<vmem>>, vector<32x256xbf16>
    %cst = arith.constant dense<0.000000e+00> : vector<8x256xf32>
    %3 = tpu.matmul %1, %2, %cst {dimension_numbers = #tpu.dot_dimension_numbers<[1], [0], [0], [1], [0, 0, 1, 1], [], []>} : vector<8x32xbf16>, vector<32x256xbf16>, vector<8x256xf32> -> vector<8x256xf32>
    %c0_3 = arith.constant 0 : index
    %c0_4 = arith.constant 0 : index
    %4 = vector.load %arg3[%c0_3, %c0_4] : memref<8x256xf32, #tpu.memory_space<vmem>>, vector<8x256xf32>
    tpu.vector_store %arg3[%c0_3, %c0_4], %3 {strides = array<i32>} : memref<8x256xf32, #tpu.memory_space<vmem>>, vector<8x256xf32>,
    return
  }
  func.func @transform_0(%arg0: i32) -> (i32, i32) {
    %c0_i32 = arith.constant 0 : i32
    %c0_i32_0 = arith.constant 0 : i32
    return %arg0, %c0_i32 : i32, i32
  }
  func.func @transform_1(%arg0: i32) -> (i32, i32) {
    %c0_i32 = arith.constant 0 : i32
    %c0_i32_0 = arith.constant 0 : i32
    %c0_i32_1 = arith.constant 0 : i32
    return %c0_i32, %c0_i32_0 : i32, i32
  }
  func.func @transform_2(%arg0: i32) -> (i32, i32) {
    %c0_i32 = arith.constant 0 : i32
    %c0_i32_0 = arith.constant 0 : i32
    return %arg0, %c0_i32 : i32, i32
  }
}

</mosaic_0001>

<llo_original>
// kernel: tpu_custom_call.1
$region0: #{tpu_custom_call.1}
  #allocation0 [shape = 'u32[]', space=smem, size = 0x4, offset = 0x4, fixed_abs, tag = 'smem constant byte address 0x4 - core index']
  #allocation1 [shape = 'u32[72,128]{1,0:T(1,128)}', space=vmem, size = 0x9000, scoped, tag = 'internal scratch']
  %s0 = inlined_call_operand.hbm [shape: f32[16,32], index: 0, kind: input, shape index: {}]
  %s1 = inlined_call_operand.hbm [shape: bf16[32,256], index: 1, kind: input, shape index: {}]
  %s2 = inlined_call_operand.hbm [shape: f32[16,256], index: 2, kind: output, shape index: {}]
  %s3 = sld [smem:[#allocation0]]
  $region49: #{tpu_custom_call.1} parent=0
    _
  %s5 = ssub.s32 1, %s3
  %s6 = scalar_select 0, %s5, %s3
  $region1: #{tpu_custom_call.1} parent=0
    #allocation2 [shape = 'u8[8192]{0}', space=vmem, size = 0x2000, scoped, tag = 'input window, operand 0']
    #allocation3 [shape = 's32[2]{0}', space=sflag, size = 0x8, scoped, tag = 'scoped memory for tpu_custom_call.1']
    #allocation4 [shape = 's32[2]{0}', space=sflag, size = 0x8, scoped, tag = 'scoped memory for tpu_custom_call.1']
    #allocation5 [shape = 'u8[16384]{0}', space=vmem, size = 0x4000, scoped, tag = 'input window, operand 1, single buffered']
    #allocation6 [shape = 's32[1]{0}', space=sflag, size = 0x4, scoped, tag = 'scoped memory for tpu_custom_call.1']
    #allocation7 [shape = 'u8[16384]{0}', space=vmem, size = 0x4000, scoped, tag = 'output window, operand 0']
    %7 = vsyncpa [#allocation3], 0
    %s8 = scalar_lea.sflag [#allocation3], 1
    %9 = vsyncpa %s8, 0
    %10 = vsyncpa [#allocation6], 0
    %11 = vsyncpa [#allocation4], 0
    %s12 = scalar_lea.sflag [#allocation4], 1
    %13 = vsyncpa %s12, 0
    loop: start=0, step=1, limit=4
    $region2: #{tpu_custom_call.1} parent=1 // loop_pre_header
      _
    $region3: #{tpu_custom_call.1} parent=1 // loop_header
      %s15 = sphi 0, %s19
      %p16 = scmp.ge.s32.totalorder %s15, 4
      %s25 = sphi 0, %s27
      %s28 = sphi 0, %s25
      %s29 = sphi 0, %s28
      %s45 = sphi 0, %s29
      %s49 = sphi 0, %s49
      %s51 = sphi 0, %s49
      %s52 = sphi 0, %s51
      %s66 = sphi 0, %s52
      %s72 = sphi 0, %s74
      %s75 = sphi 0, %s72
      %s76 = sphi 0, %s75
      %s92 = sphi 0, %s76
    $region4: #{tpu_custom_call.1} parent=1 // loop_header_branch
      %18 = sbr.rel (%p16) target = $region8
    $region5: #{tpu_custom_call.1} parent=1 // loop_body
      %s20 = ssub.s32 %s15, 1
      %s21 = ssub.s32 %s15, 2
      %s22 = sadd.s32 %s15, 1
      %s23 = ssub.s32 %s15, %s22
      %p24 = scmp.eq.s32.totalorder %s23, 0
      %s26 = sadd.s32 %s25, 1
      %s27 = scalar_select %p24, %s25, %s26
      %p30 = pneg %p24
      %p31 = scmp.eq.s32.totalorder %s15, 1
      %p32 = por %p30, %p31
      %p33 = scmp.ne.s32.totalorder %s25, %s28
      %p34 = scmp.eq.s32.totalorder %s15, 0
      %p35 = por %p33, %p34
      %p36 = scmp.ne.s32.totalorder %s25, %s28
      %p37 = scmp.eq.s32.totalorder %s20, 1
      %p38 = por %p36, %p37
      %p39 = scmp.ne.s32.totalorder %s28, %s29
      %p40 = scmp.eq.s32.totalorder %s20, 0
      %p41 = por %p39, %p40
      %p42 = scmp.ne.s32.totalorder %s28, %s29
      %p43 = scmp.eq.s32.totalorder %s21, 1
      %p44 = por %p42, %p43
      %p46 = scmp.ne.s32.totalorder %s29, %s45
      %p47 = scmp.eq.s32.totalorder %s21, 0
      %p48 = por %p46, %p47
      %s50 = sadd.s32 %s49, 1
      %p53 = scmp.eq.s32.totalorder %s15, 1
      %p54 = scmp.ne.s32.totalorder %s49, %s51
      %p55 = scmp.eq.s32.totalorder %s15, 0
      %p56 = por %p54, %p55
      %p57 = scmp.ne.s32.totalorder %s49, %s51
      %p58 = scmp.eq.s32.totalorder %s20, 1
      %p59 = por %p57, %p58
      %p60 = scmp.ne.s32.totalorder %s51, %s52
      %p61 = scmp.eq.s32.totalorder %s20, 0
      %p62 = por %p60, %p61
      %p63 = scmp.ne.s32.totalorder %s51, %s52
      %p64 = scmp.eq.s32.totalorder %s21, 1
      %p65 = por %p63, %p64
      %p67 = scmp.ne.s32.totalorder %s52, %s66
      %p68 = scmp.eq.s32.totalorder %s21, 0
      %p69 = por %p67, %p68
      %s70 = ssub.s32 %s15, %s22
      %p71 = scmp.eq.s32.totalorder %s70, 0
      %s73 = sadd.s32 %s72, 1
      %s74 = scalar_select %p71, %s72, %s73
      %p77 = pneg %p71
      %p78 = scmp.eq.s32.totalorder %s15, 1
      %p79 = por %p77, %p78
      %p80 = scmp.ne.s32.totalorder %s72, %s75
      %p81 = scmp.eq.s32.totalorder %s15, 0
      %p82 = por %p80, %p81
      %p83 = scmp.ne.s32.totalorder %s72, %s75
      %p84 = scmp.eq.s32.totalorder %s20, 1
      %p85 = por %p83, %p84
      %p86 = scmp.ne.s32.totalorder %s75, %s76
      %p87 = scmp.eq.s32.totalorder %s20, 0
      %p88 = por %p86, %p87
      %p89 = scmp.ne.s32.totalorder %s75, %s76
      %p90 = scmp.eq.s32.totalorder %s21, 1
      %p91 = por %p89, %p90
      %p93 = scmp.ne.s32.totalorder %s76, %s92
      %p94 = scmp.eq.s32.totalorder %s21, 0
      %p95 = por %p93, %p94
      %p96 = scmp.le.s32.totalorder 1, %s15
      %p97 = scmp.lt.s32.totalorder %s15, 3
      %p98 = pnand %p96, %p97
      %p99 = pneg %p98
      // Predicated region
      $region9: #{tpu_custom_call.1} parent=5 // pred_check
        _
      $region10: #{tpu_custom_call.1} parent=5 // pred_check_branch
        %101 = sbr.rel (%p98) target = $region12
      $region11: #{tpu_custom_call.1} parent=5 // pred_region
        %s102 = ssub.s32 %s15, 1
        // Predicated region
        $region13: #{tpu_custom_call.1} parent=11 // pred_check
          %p103 = pneg %p62
        $region14: #{tpu_custom_call.1} parent=11 // pred_check_branch
          %105 = sbr.rel (%p103) target = $region16
        $region15: #{tpu_custom_call.1} parent=11 // pred_region
          %107 = vsyncadd [#allocation6], 0
          %s108 = sshll.u32 %s1, 4
          %s109 = int_to_ptr.hbm [resolvable:$true] %s108
          %s110 = sshll.u32 [#allocation5], 4
          %s111 = int_to_ptr.vmem [resolvable:$true] %s110
          %116 = dma.hbm_to_vmem [thread:$0]  %s109, 512, %s111, [#allocation6], 128, 128, 8
        $region16: #{tpu_custom_call.1} parent=11 // pred_fallthru
          _
      $region12: #{tpu_custom_call.1} parent=5 // pred_fallthru
        _
      %p117 = scmp.lt.s32.totalorder %s15, 2
      // Predicated region
      $region17: #{tpu_custom_call.1} parent=5 // pred_check
        %p118 = pneg %p117
      $region18: #{tpu_custom_call.1} parent=5 // pred_check_branch
        %120 = sbr.rel (%p118) target = $region20
      $region19: #{tpu_custom_call.1} parent=5 // pred_region
        // Predicated region
        $region21: #{tpu_custom_call.1} parent=19 // pred_check
          %p121 = pneg %p35
        $region22: #{tpu_custom_call.1} parent=19 // pred_check_branch
          %123 = sbr.rel (%p121) target = $region24
        $region23: #{tpu_custom_call.1} parent=19 // pred_region
          %s124 = sand.u32 %s25, 1
          %s125 = scalar_lea.sflag [#allocation3], %s124
          %s126 = sand.u32 %s25, 1
          %s127 = smul.addr %s126, 8
          %s128 = scalar_lea.vmem [#allocation2], %s127
          %130 = vsyncadd %s125, 0
          %s131 = smul.addr %s15, 8
          %s132 = scalar_lea.hbm %s0, %s131
          %s134 = sshll.u32 %s132, 4
          %s135 = int_to_ptr.hbm [resolvable:$true] %s134
          %s136 = sshll.u32 %s128, 4
          %s137 = int_to_ptr.vmem [resolvable:$true] %s136
          %139 = dma.hbm_to_vmem [thread:$0]  %s135, 128, %s137, %s125
        $region24: #{tpu_custom_call.1} parent=19 // pred_fallthru
          _
      $region20: #{tpu_custom_call.1} parent=5 // pred_fallthru
        _
      %p140 = scmp.le.s32.totalorder 1, %s15
      %p141 = scmp.lt.s32.totalorder %s15, 3
      %p142 = pnand %p140, %p141
      %p143 = pneg %p142
      // Predicated region
      $region25: #{tpu_custom_call.1} parent=5 // pred_check
        _
      $region26: #{tpu_custom_call.1} parent=5 // pred_check_branch
        %145 = sbr.rel (%p142) target = $region28
      $region27: #{tpu_custom_call.1} parent=5 // pred_region
        %s146 = ssub.s32 %s15, 1
        %s147 = sand.u32 %s28, 1
        %s148 = scalar_lea.sflag [#allocation3], %s147
        %s149 = sand.u32 %s28, 1
        %s150 = smul.addr %s149, 8
        %s151 = scalar_lea.vmem [#allocation2], %s150
        // Predicated region
        $region29: #{tpu_custom_call.1} parent=27 // pred_check
          %p152 = pneg %p41
        $region30: #{tpu_custom_call.1} parent=27 // pred_check_branch
          %154 = sbr.rel (%p152) target = $region32
        $region31: #{tpu_custom_call.1} parent=27 // pred_region
          %156 = dma.done %s148, 128
        $region32: #{tpu_custom_call.1} parent=27 // pred_fallthru
          _
        // Predicated region
        $region33: #{tpu_custom_call.1} parent=27 // pred_check
          %p157 = pneg %p62
        $region34: #{tpu_custom_call.1} parent=27 // pred_check_branch
          %159 = sbr.rel (%p157) target = $region36
        $region35: #{tpu_custom_call.1} parent=27 // pred_region
          %161 = dma.done [#allocation6], 512
        $region36: #{tpu_custom_call.1} parent=27 // pred_fallthru
          _
        %s162 = sand.u32 %s28, 1
        %s163 = scalar_lea.sflag [#allocation3], %s162
        %s164 = sand.u32 %s28, 1
        %s165 = smul.addr %s164, 8
        %s166 = scalar_lea.vmem [#allocation2], %s165
        %p167 = pneg %p41
        %p168 = pneg %p38
        %p169 = pneg %p62
        %p170 = pneg %p59
        %p171 = pneg %p88
        %p172 = pneg %p85
        %s173 = sand.u32 %s75, 1
        %s174 = scalar_lea.sflag [#allocation4], %s173
        %s175 = sand.u32 %s75, 1
        %s176 = smul.addr %s175, 16
        %s177 = scalar_lea.vmem [#allocation7], %s176
        %v179 = vld [vmem:[%s151] sm:$0xff]
        %v180 = vpack.c.bf16 %v179, %v179
        %v181 = vld [vmem:[#allocation5] sm:$0xff]
        %v182 = vld [vmem:[#allocation5 + $0x8] sm:$0xff]
        %v183 = vld [vmem:[#allocation5 + $0x10] sm:$0xff]
        %v184 = vld [vmem:[#allocation5 + $0x18] sm:$0xff]
        %v189 = vunpack.c.l.b16 %v181
        %v190 = vunpack.c.h.b16 %v181
        %v191 = vunpack.c.l.b16 %v182
        %v192 = vunpack.c.h.b16 %v182
        %v193 = vunpack.c.l.b16 %v183
        %v194 = vunpack.c.h.b16 %v183
        %v195 = vunpack.c.l.b16 %v184
        %v196 = vunpack.c.h.b16 %v184
        %v197 = vpack.c.b16 %v191, %v189
        %v198 = vpack.c.b16 %v192, %v190
        %v199 = vpack.c.b16 %v195, %v193
        %v200 = vpack.c.b16 %v196, %v194
        %vm205 = vcmask 261120
        %v207 = vsel %vm205, %v180, 0
        %209 = vmatpush.bf16.msra.mxu0 0
        %210 = vmatpush.bf16.msra.mxu0 0
        %211 = vmatpush.bf16.msra.mxu0 0
        %212 = vmatpush.bf16.msra.mxu0 0
        %213 = vmatpush.bf16.msra.mxu0 0
        %214 = vmatpush.bf16.msra.mxu0 0
        %215 = vmatpush.bf16.msra.mxu0 %v199
        %216 = vmatpush.bf16.msra.mxu0 %v197
        %217 = vmatmul.bf16.gmra.mxu0 %v207
        %v218 = vpop.f32.mrf.mxu0
        %v219 = vadd.f32 0.0, %v218
        %v220 = vpop.f32.mrf.mxu0
        %221 = vdwg.mxu0
        %222 = vmatpush.bf16.msra.mxu0 0
        %223 = vmatpush.bf16.msra.mxu0 0
        %224 = vmatpush.bf16.msra.mxu0 0
        %225 = vmatpush.bf16.msra.mxu0 0
        %226 = vmatpush.bf16.msra.mxu0 0
        %227 = vmatpush.bf16.msra.mxu0 0
        %228 = vmatpush.bf16.msra.mxu0 %v200
        %229 = vmatpush.bf16.msra.mxu0 %v198
        %230 = vmatmul.bf16.gmra.mxu0 %v207
        %v231 = vpop.f32.mrf.mxu0
        %v232 = vadd.f32 0.0, %v231
        %v233 = vpop.f32.mrf.mxu0
        %234 = vdwg.mxu0
        %235 = vst [vmem:[%s177] sm:$0xff] %v219
        %236 = vst [vmem:[%s177 + $0x8] sm:$0xff] %v232
        %s237 = sand.u32 %s75, 1
        %s238 = scalar_lea.sflag [#allocation4], %s237
        %s239 = sand.u32 %s75, 1
        %s240 = smul.addr %s239, 16
        %s241 = scalar_lea.vmem [#allocation7], %s240
        // Predicated region
        $region37: #{tpu_custom_call.1} parent=27 // pred_check
          %p242 = pneg %p85
        $region38: #{tpu_custom_call.1} parent=27 // pred_check_branch
          %244 = sbr.rel (%p242) target = $region40
        $region39: #{tpu_custom_call.1} parent=27 // pred_region
          %246 = vsyncadd %s238, 0
          %s247 = smul.addr %s20, 2
          %s248 = smul.addr %s247, 8
          %s249 = scalar_lea.hbm %s2, %s248
          %s251 = sshll.u32 %s241, 4
          %s252 = int_to_ptr.vmem [resolvable:$true] %s251
          %s253 = sshll.u32 %s249, 4
          %s254 = int_to_ptr.hbm [resolvable:$true] %s253
          %256 = dma.vmem_to_hbm [thread:$0]  %s252, 256, %s254, %s238
        $region40: #{tpu_custom_call.1} parent=27 // pred_fallthru
          _
      $region28: #{tpu_custom_call.1} parent=5 // pred_fallthru
        _
      %p257 = scmp.le.s32.totalorder 2, %s15
      // Predicated region
      $region41: #{tpu_custom_call.1} parent=5 // pred_check
        %p258 = pneg %p257
      $region42: #{tpu_custom_call.1} parent=5 // pred_check_branch
        %260 = sbr.rel (%p258) target = $region44
      $region43: #{tpu_custom_call.1} parent=5 // pred_region
        %s261 = ssub.s32 %s15, 2
        // Predicated region
        $region45: #{tpu_custom_call.1} parent=43 // pred_check
          %p262 = pneg %p91
        $region46: #{tpu_custom_call.1} parent=43 // pred_check_branch
          %264 = sbr.rel (%p262) target = $region48
        $region47: #{tpu_custom_call.1} parent=43 // pred_region
          %s265 = sand.u32 %s76, 1
          %s266 = scalar_lea.sflag [#allocation4], %s265
          %s267 = sand.u32 %s76, 1
          %s268 = smul.addr %s267, 16
          %s269 = scalar_lea.vmem [#allocation7], %s268
          %271 = dma.done %s266, 256
        $region48: #{tpu_custom_call.1} parent=43 // pred_fallthru
          _
      $region44: #{tpu_custom_call.1} parent=5 // pred_fallthru
        _
    $region6: #{tpu_custom_call.1} parent=1 // loop_footer
      %s19 = sadd.s32 1, %s15
    $region7: #{tpu_custom_call.1} parent=1 // loop_footer_branch
      %14 = sbr.rel target = $region3
    $region8: #{tpu_custom_call.1} parent=1 // loop_exit
      _
    %272 = vsyncpa [#allocation3], 1
    %s273 = scalar_lea.sflag [#allocation3], 1
    %274 = vsyncpa %s273, 1
    %275 = vsyncpa [#allocation6], 1
    %276 = vsyncpa [#allocation4], 1
    %s277 = scalar_lea.sflag [#allocation4], 1
    %278 = vsyncpa %s277, 1

</llo_original>
